<compile_context>
chip_gen: v7x
topology: tpu7x:2x2x1
jax: 0.10.0
libtpu: 0.0.40
codegen_flags: <defaults>
</compile_context>

<pallas_src>
import jax
import jax.numpy as jnp
from jax.experimental import pallas as pl
from jax.experimental.pallas import tpu as pltpu


def _hardswish(x):
    # PyTorch Hardswish: x * relu6(x + 3) / 6
    return x * jnp.clip(x + 3.0, 0.0, 6.0) * (1.0 / 6.0)


def actor_sac_kernel(x_ref,
                     w1_ref, b1_ref,
                     w2_ref, b2_ref,
                     w3_ref, b3_ref,
                     w4_ref, b4_ref,
                     w5_ref, b5_ref,
                     out_ref):
    # Dot operands in bf16 (f32 accumulation on the MXU); elementwise in f32.
    x = x_ref[...]                                   # already bf16 (streamed)

    # net_state: Linear + ReLU, Linear + ReLU, Linear + ReLU
    h = jnp.dot(x, w1_ref[...], preferred_element_type=jnp.float32) + b1_ref[...]
    h = jnp.maximum(h, 0.0)
    h = jnp.dot(h.astype(jnp.bfloat16), w2_ref[...],
                preferred_element_type=jnp.float32) + b2_ref[...]
    h = jnp.maximum(h, 0.0)
    h = jnp.dot(h.astype(jnp.bfloat16), w3_ref[...],
                preferred_element_type=jnp.float32) + b3_ref[...]
    h = jnp.maximum(h, 0.0)

    # net_a_avg: Linear + Hardswish, Linear, then tanh
    g = jnp.dot(h.astype(jnp.bfloat16), w4_ref[...],
                preferred_element_type=jnp.float32) + b4_ref[...]
    g = _hardswish(g)
    a = jnp.dot(g.astype(jnp.bfloat16), w5_ref[...],
                preferred_element_type=jnp.float32) + b5_ref[...]

    out_ref[...] = jnp.tanh(a).astype(out_ref.dtype)


def _round_up(x, m):
    return ((x + m - 1) // m) * m


def _choose_batch_tile(batch):
    """Pick the batch-tile size.

    Goals (from the perf review):
      * tiles as large as possible (<= ~2048 rows) to amortize the
        ~0.35 us/grid-step overhead and keep the MXU M-side fed,
      * but at least 2 tiles (even count) whenever the batch allows it so the
        "parallel" grid axis shards across both v7x TensorCores,
      * tiles a multiple of 16 rows (bf16 sublane packing), minimal padding.
    """
    if batch <= 32:
        return _round_up(batch, 16)               # tiny batch: single tile
    n_tiles = max(2, -(-batch // 2048))           # enough tiles of <= 2048 rows
    n_tiles = _round_up(n_tiles, 2)               # even -> balanced across 2 TCs
    return _round_up(-(-batch // n_tiles), 16)


@jax.jit
def actor_sac_forward(state, params):
    """state: (B, state_dim). params: *prepared* params (see prepare_params)."""
    B, state_dim = state.shape
    mid_dim = params["w1"].shape[1]
    action_dim = params["w5"].shape[1]

    tb = _choose_batch_tile(B)
    num_tiles = -(-B // tb)
    padded_b = num_tiles * tb

    # Stream the state as bf16 (halves input DMA + double-buffer).
    x = state.astype(jnp.bfloat16)
    if padded_b != B:
        x = jnp.pad(x, ((0, padded_b - B), (0, 0)))

    w1, b1 = params["w1"], params["b1"]
    w2, b2 = params["w2"], params["b2"]
    w3, b3 = params["w3"], params["b3"]
    w4, b4 = params["w4"], params["b4"]
    w5, b5 = params["w5"], params["b5"]

    def pinned(arr):
        # Full-array block with a constant index_map -> stays resident in VMEM
        # across all grid iterations (no re-DMA).
        return pl.BlockSpec(arr.shape, lambda i: (0, 0))

    in_specs = [
        pl.BlockSpec((tb, state_dim), lambda i: (i, 0)),   # streamed state tile
        pinned(w1), pinned(b1),
        pinned(w2), pinned(b2),
        pinned(w3), pinned(b3),
        pinned(w4), pinned(b4),
        pinned(w5), pinned(b5),
    ]
    # Narrow f32 output block: contiguous HBM region per tile, 16x less
    # writeback than a 128-lane padded slab, keeps f32 precision.
    out_specs = pl.BlockSpec((tb, action_dim), lambda i: (i, 0))

    weight_elems = (state_dim * mid_dim + 3 * mid_dim * mid_dim
                    + mid_dim * action_dim)
    bias_elems = 4 * mid_dim + action_dim

    # VMEM budget: double-buffered streams + (default double-buffered) pinned
    # weights, with 2x headroom, floored at 32 MiB (>= every chip's default
    # scoped limit) and capped at 128 MiB.
    stream_bytes = 2 * (tb * state_dim * 2 + tb * action_dim * 4)
    pinned_bytes = 2 * (weight_elems * 2 + bias_elems * 4)
    vmem_limit = int(max(32 << 20,
                         min(128 << 20,
                             2 * (stream_bytes + pinned_bytes) + (1 << 20))))

    cost = pl.CostEstimate(
        flops=2 * padded_b * weight_elems,
        transcendentals=padded_b * action_dim,               # final tanh
        bytes_accessed=(padded_b * state_dim * 2             # bf16 input
                        + padded_b * action_dim * 4          # f32 output
                        + weight_elems * 2                   # bf16 weights
                        + bias_elems * 4),                   # f32 biases
    )

    out = pl.pallas_call(
        actor_sac_kernel,
        out_shape=jax.ShapeDtypeStruct((padded_b, action_dim), jnp.float32),
        grid=(num_tiles,),
        in_specs=in_specs,
        out_specs=out_specs,
        compiler_params=pltpu.CompilerParams(
            dimension_semantics=("parallel",),     # v7x: 2 TCs share the batch
            vmem_limit_bytes=vmem_limit),
        cost_estimate=cost,
    )(x, w1, b1, w2, b2, w3, b3, w4, b4, w5, b5)

    return out[:B]


def prepare_params(params):
    """One-time weight preparation (hoisted out of the forward path):
    bf16 weights for full-rate MXU, f32 biases for VPU adds."""
    prepped = {}
    for i in range(1, 6):
        prepped[f"w{i}"] = jnp.asarray(params[f"w{i}"], jnp.bfloat16)
        prepped[f"b{i}"] = jnp.asarray(params[f"b{i}"], jnp.float32)
    return prepped


def init_params(key, state_dim, mid_dim, action_dim):
    """Deterministic init mimicking PyTorch Linear default (U(-1/sqrt(fan_in), +))."""
    dims = [(state_dim, mid_dim),   # net_state Linear 1
            (mid_dim, mid_dim),     # net_state Linear 2
            (mid_dim, mid_dim),     # net_state Linear 3
            (mid_dim, mid_dim),     # net_a_avg Linear 1
            (mid_dim, action_dim)]  # net_a_avg Linear 2
    params = {}
    for i, (fan_in, fan_out) in enumerate(dims, start=1):
        key, kw, kb = jax.random.split(key, 3)
        bound = 1.0 / jnp.sqrt(float(fan_in))
        # stored as (in, out): already transposed relative to PyTorch's (out, in)
        params[f"w{i}"] = jax.random.uniform(
            kw, (fan_in, fan_out), jnp.float32, -bound, bound)
        params[f"b{i}"] = jax.random.uniform(
            kb, (1, fan_out), jnp.float32, -bound, bound)
    return params


def reference_forward(state, params):
    """Plain-JAX reference with matching bf16 matmul operands / f32 math."""
    def dot(x, w):
        return jnp.dot(x.astype(jnp.bfloat16), w.astype(jnp.bfloat16),
                       preferred_element_type=jnp.float32)

    h = jnp.maximum(dot(state, params["w1"]) + params["b1"], 0.0)
    h = jnp.maximum(dot(h, params["w2"]) + params["b2"], 0.0)
    h = jnp.maximum(dot(h, params["w3"]) + params["b3"], 0.0)
    g = _hardswish(dot(h, params["w4"]) + params["b4"])
    return jnp.tanh(dot(g, params["w5"]) + params["b5"])


if __name__ == "__main__":
    state_dim, mid_dim, action_dim = 16, 32, 8

    key = jax.random.PRNGKey(0)
    key, k_params = jax.random.split(key)
    params = init_params(k_params, state_dim, mid_dim, action_dim)
    prepped = prepare_params(params)        # one-time cast, reused every call

    # Small single-tile batch (module-consistent shapes).
    key, k1 = jax.random.split(key)
    state_small = jax.random.normal(k1, (8, state_dim), jnp.float32)
    out_small = jax.block_until_ready(actor_sac_forward(state_small, prepped))
    ref_small = reference_forward(state_small, params)
    assert out_small.shape == (8, action_dim)
    assert jnp.allclose(out_small, ref_small, atol=1e-4, rtol=1e-4), \
        "small-batch mismatch vs JAX reference"

    # Multi-tile batch: exercises the batch grid (2 tiles), padding, and
    # pinned weights.
    key, k2 = jax.random.split(key)
    state_big = jax.random.normal(k2, (260, state_dim), jnp.float32)
    out_big = jax.block_until_ready(actor_sac_forward(state_big, prepped))
    ref_big = reference_forward(state_big, params)
    assert out_big.shape == (260, action_dim)
    assert jnp.allclose(out_big, ref_big, atol=1e-4, rtol=1e-4), \
        "tiled-batch mismatch vs JAX reference"

    print("KERNEL_OK")
</pallas_src>

<mosaic_0001>
module attributes {stable_mosaic.version = 11 : i64} {
  func.func @actor_sac_kernel(%arg0: i32, %arg1: memref<16x16xbf16, #tpu.memory_space<vmem>>, %arg2: memref<16x32xbf16, #tpu.memory_space<vmem>>, %arg3: memref<1x32xf32, #tpu.memory_space<vmem>>, %arg4: memref<32x32xbf16, #tpu.memory_space<vmem>>, %arg5: memref<1x32xf32, #tpu.memory_space<vmem>>, %arg6: memref<32x32xbf16, #tpu.memory_space<vmem>>, %arg7: memref<1x32xf32, #tpu.memory_space<vmem>>, %arg8: memref<32x32xbf16, #tpu.memory_space<vmem>>, %arg9: memref<1x32xf32, #tpu.memory_space<vmem>>, %arg10: memref<32x8xbf16, #tpu.memory_space<vmem>>, %arg11: memref<1x8xf32, #tpu.memory_space<vmem>>, %arg12: memref<16x8xf32, #tpu.memory_space<vmem>>) attributes {dimension_semantics = [#tpu.dimension_semantics<parallel>], iteration_bounds = array<i64: 1>, scalar_prefetch = 0 : i64, scratch_operands = 0 : i64, tpu.core_type = #tpu.core_type<tc>, window_params = [{transform_indices = @transform_0, window_bounds = array<i64: 16, 16>}, {pipeline_mode = #tpu.pipeline_mode<synchronous>, transform_indices = @transform_1, window_bounds = array<i64: 16, 32>}, {pipeline_mode = #tpu.pipeline_mode<synchronous>, transform_indices = @transform_2, window_bounds = array<i64: 1, 32>}, {pipeline_mode = #tpu.pipeline_mode<synchronous>, transform_indices = @transform_3, window_bounds = array<i64: 32, 32>}, {pipeline_mode = #tpu.pipeline_mode<synchronous>, transform_indices = @transform_4, window_bounds = array<i64: 1, 32>}, {pipeline_mode = #tpu.pipeline_mode<synchronous>, transform_indices = @transform_5, window_bounds = array<i64: 32, 32>}, {pipeline_mode = #tpu.pipeline_mode<synchronous>, transform_indices = @transform_6, window_bounds = array<i64: 1, 32>}, {pipeline_mode = #tpu.pipeline_mode<synchronous>, transform_indices = @transform_7, window_bounds = array<i64: 32, 32>}, {pipeline_mode = #tpu.pipeline_mode<synchronous>, transform_indices = @transform_8, window_bounds = array<i64: 1, 32>}, {pipeline_mode = #tpu.pipeline_mode<synchronous>, transform_indices = @transform_9, window_bounds = array<i64: 32, 8>}, {pipeline_mode = #tpu.pipeline_mode<synchronous>, transform_indices = @transform_10, window_bounds = array<i64: 1, 8>}, {transform_indices = @transform_11, window_bounds = array<i64: 16, 8>}]} {
    %c0 = arith.constant 0 : index
    %c0_0 = arith.constant 0 : index
    %0 = vector.load %arg1[%c0, %c0_0] : memref<16x16xbf16, #tpu.memory_space<vmem>>, vector<16x16xbf16>
    %c0_1 = arith.constant 0 : index
    %c0_2 = arith.constant 0 : index
    %1 = vector.load %arg2[%c0_1, %c0_2] : memref<16x32xbf16, #tpu.memory_space<vmem>>, vector<16x32xbf16>
    %cst = arith.constant dense<0.000000e+00> : vector<16x32xf32>
    %2 = tpu.matmul %0, %1, %cst {dimension_numbers = #tpu.dot_dimension_numbers<[1], [0], [0], [1], [0, 0, 1, 1], [], []>} : vector<16x16xbf16>, vector<16x32xbf16>, vector<16x32xf32> -> vector<16x32xf32>
    %c0_3 = arith.constant 0 : index
    %c0_4 = arith.constant 0 : index
    %3 = vector.load %arg3[%c0_3, %c0_4] : memref<1x32xf32, #tpu.memory_space<vmem>>, vector<1x32xf32>
    %4 = vector.broadcast %3 : vector<1x32xf32> to vector<16x32xf32>
    %5 = arith.addf %2, %4 : vector<16x32xf32>
    %cst_5 = arith.constant 0.000000e+00 : f32
    %6 = vector.broadcast %cst_5 : f32 to vector<16x32xf32>
    %7 = arith.maximumf %5, %6 : vector<16x32xf32>
    %8 = arith.truncf %7 : vector<16x32xf32> to vector<16x32xbf16>
    %c0_6 = arith.constant 0 : index
    %c0_7 = arith.constant 0 : index
    %9 = vector.load %arg4[%c0_6, %c0_7] : memref<32x32xbf16, #tpu.memory_space<vmem>>, vector<32x32xbf16>
    %cst_8 = arith.constant dense<0.000000e+00> : vector<16x32xf32>
    %10 = tpu.matmul %8, %9, %cst_8 {dimension_numbers = #tpu.dot_dimension_numbers<[1], [0], [0], [1], [0, 0, 1, 1], [], []>} : vector<16x32xbf16>, vector<32x32xbf16>, vector<16x32xf32> -> vector<16x32xf32>
    %c0_9 = arith.constant 0 : index
    %c0_10 = arith.constant 0 : index
    %11 = vector.load %arg5[%c0_9, %c0_10] : memref<1x32xf32, #tpu.memory_space<vmem>>, vector<1x32xf32>
    %12 = vector.broadcast %11 : vector<1x32xf32> to vector<16x32xf32>
    %13 = arith.addf %10, %12 : vector<16x32xf32>
    %cst_11 = arith.constant 0.000000e+00 : f32
    %14 = vector.broadcast %cst_11 : f32 to vector<16x32xf32>
    %15 = arith.maximumf %13, %14 : vector<16x32xf32>
    %16 = arith.truncf %15 : vector<16x32xf32> to vector<16x32xbf16>
    %c0_12 = arith.constant 0 : index
    %c0_13 = arith.constant 0 : index
    %17 = vector.load %arg6[%c0_12, %c0_13] : memref<32x32xbf16, #tpu.memory_space<vmem>>, vector<32x32xbf16>
    %cst_14 = arith.constant dense<0.000000e+00> : vector<16x32xf32>
    %18 = tpu.matmul %16, %17, %cst_14 {dimension_numbers = #tpu.dot_dimension_numbers<[1], [0], [0], [1], [0, 0, 1, 1], [], []>} : vector<16x32xbf16>, vector<32x32xbf16>, vector<16x32xf32> -> vector<16x32xf32>
    %c0_15 = arith.constant 0 : index
    %c0_16 = arith.constant 0 : index
    %19 = vector.load %arg7[%c0_15, %c0_16] : memref<1x32xf32, #tpu.memory_space<vmem>>, vector<1x32xf32>
    %20 = vector.broadcast %19 : vector<1x32xf32> to vector<16x32xf32>
    %21 = arith.addf %18, %20 : vector<16x32xf32>
    %cst_17 = arith.constant 0.000000e+00 : f32
    %22 = vector.broadcast %cst_17 : f32 to vector<16x32xf32>
    %23 = arith.maximumf %21, %22 : vector<16x32xf32>
    %24 = arith.truncf %23 : vector<16x32xf32> to vector<16x32xbf16>
    %c0_18 = arith.constant 0 : index
    %c0_19 = arith.constant 0 : index
    %25 = vector.load %arg8[%c0_18, %c0_19] : memref<32x32xbf16, #tpu.memory_space<vmem>>, vector<32x32xbf16>
    %cst_20 = arith.constant dense<0.000000e+00> : vector<16x32xf32>
    %26 = tpu.matmul %24, %25, %cst_20 {dimension_numbers = #tpu.dot_dimension_numbers<[1], [0], [0], [1], [0, 0, 1, 1], [], []>} : vector<16x32xbf16>, vector<32x32xbf16>, vector<16x32xf32> -> vector<16x32xf32>
    %c0_21 = arith.constant 0 : index
    %c0_22 = arith.constant 0 : index
    %27 = vector.load %arg9[%c0_21, %c0_22] : memref<1x32xf32, #tpu.memory_space<vmem>>, vector<1x32xf32>
    %28 = vector.broadcast %27 : vector<1x32xf32> to vector<16x32xf32>
    %29 = arith.addf %26, %28 : vector<16x32xf32>
    %cst_23 = arith.constant 3.000000e+00 : f32
    %30 = vector.broadcast %cst_23 : f32 to vector<16x32xf32>
    %31 = arith.addf %29, %30 : vector<16x32xf32>
    %cst_24 = arith.constant 0.000000e+00 : f32
    %cst_25 = arith.constant 6.000000e+00 : f32
    %32 = vector.broadcast %cst_24 : f32 to vector<16x32xf32>
    %33 = arith.maximumf %32, %31 : vector<16x32xf32>
    %34 = vector.broadcast %cst_25 : f32 to vector<16x32xf32>
    %35 = arith.minimumf %34, %33 : vector<16x32xf32>
    %36 = arith.mulf %29, %35 : vector<16x32xf32>
    %cst_26 = arith.constant 0.166666672 : f32
    %37 = vector.broadcast %cst_26 : f32 to vector<16x32xf32>
    %38 = arith.mulf %36, %37 : vector<16x32xf32>
    %39 = arith.truncf %38 : vector<16x32xf32> to vector<16x32xbf16>
    %c0_27 = arith.constant 0 : index
    %c0_28 = arith.constant 0 : index
    %40 = vector.load %arg10[%c0_27, %c0_28] : memref<32x8xbf16, #tpu.memory_space<vmem>>, vector<32x8xbf16>
    %cst_29 = arith.constant dense<0.000000e+00> : vector<16x8xf32>
    %41 = tpu.matmul %39, %40, %cst_29 {dimension_numbers = #tpu.dot_dimension_numbers<[1], [0], [0], [1], [0, 0, 1, 1], [], []>} : vector<16x32xbf16>, vector<32x8xbf16>, vector<16x8xf32> -> vector<16x8xf32>
    %c0_30 = arith.constant 0 : index
    %c0_31 = arith.constant 0 : index
    %42 = vector.load %arg11[%c0_30, %c0_31] : memref<1x8xf32, #tpu.memory_space<vmem>>, vector<1x8xf32>
    %43 = vector.broadcast %42 : vector<1x8xf32> to vector<16x8xf32>
    %44 = arith.addf %41, %43 : vector<16x8xf32>
    %45 = math.tanh %44 : vector<16x8xf32>
    %c0_32 = arith.constant 0 : index
    %c0_33 = arith.constant 0 : index
    %46 = vector.load %arg12[%c0_32, %c0_33] : memref<16x8xf32, #tpu.memory_space<vmem>>, vector<16x8xf32>
    tpu.vector_store %arg12[%c0_32, %c0_33], %45 {strides = array<i32>} : memref<16x8xf32, #tpu.memory_space<vmem>>, vector<16x8xf32>,
    return
  }
  func.func @transform_0(%arg0: i32) -> (i32, i32) {
    %c0_i32 = arith.constant 0 : i32
    %c0_i32_0 = arith.constant 0 : i32
    return %arg0, %c0_i32 : i32, i32
  }
  func.func @transform_1(%arg0: i32) -> (i32, i32) {
    %c0_i32 = arith.constant 0 : i32
    %c0_i32_0 = arith.constant 0 : i32
    %c0_i32_1 = arith.constant 0 : i32
    return %c0_i32, %c0_i32_0 : i32, i32
  }
  func.func @transform_2(%arg0: i32) -> (i32, i32) {
    %c0_i32 = arith.constant 0 : i32
    %c0_i32_0 = arith.constant 0 : i32
    %c0_i32_1 = arith.constant 0 : i32
    return %c0_i32, %c0_i32_0 : i32, i32
  }
  func.func @transform_3(%arg0: i32) -> (i32, i32) {
    %c0_i32 = arith.constant 0 : i32
    %c0_i32_0 = arith.constant 0 : i32
    %c0_i32_1 = arith.constant 0 : i32
    return %c0_i32, %c0_i32_0 : i32, i32
  }
  func.func @transform_4(%arg0: i32) -> (i32, i32) {
    %c0_i32 = arith.constant 0 : i32
    %c0_i32_0 = arith.constant 0 : i32
    %c0_i32_1 = arith.constant 0 : i32
    return %c0_i32, %c0_i32_0 : i32, i32
  }
  func.func @transform_5(%arg0: i32) -> (i32, i32) {
    %c0_i32 = arith.constant 0 : i32
    %c0_i32_0 = arith.constant 0 : i32
    %c0_i32_1 = arith.constant 0 : i32
    return %c0_i32, %c0_i32_0 : i32, i32
  }
  func.func @transform_6(%arg0: i32) -> (i32, i32) {
    %c0_i32 = arith.constant 0 : i32
    %c0_i32_0 = arith.constant 0 : i32
    %c0_i32_1 = arith.constant 0 : i32
    return %c0_i32, %c0_i32_0 : i32, i32
  }
  func.func @transform_7(%arg0: i32) -> (i32, i32) {
    %c0_i32 = arith.constant 0 : i32
    %c0_i32_0 = arith.constant 0 : i32
    %c0_i32_1 = arith.constant 0 : i32
    return %c0_i32, %c0_i32_0 : i32, i32
  }
  func.func @transform_8(%arg0: i32) -> (i32, i32) {
    %c0_i32 = arith.constant 0 : i32
    %c0_i32_0 = arith.constant 0 : i32
    %c0_i32_1 = arith.constant 0 : i32
    return %c0_i32, %c0_i32_0 : i32, i32
  }
  func.func @transform_9(%arg0: i32) -> (i32, i32) {
    %c0_i32 = arith.constant 0 : i32
    %c0_i32_0 = arith.constant 0 : i32
    %c0_i32_1 = arith.constant 0 : i32
    return %c0_i32, %c0_i32_0 : i32, i32
  }
  func.func @transform_10(%arg0: i32) -> (i32, i32) {
    %c0_i32 = arith.constant 0 : i32
    %c0_i32_0 = arith.constant 0 : i32
    %c0_i32_1 = arith.constant 0 : i32
    return %c0_i32, %c0_i32_0 : i32, i32
  }
  func.func @transform_11(%arg0: i32) -> (i32, i32) {
    %c0_i32 = arith.constant 0 : i32
    %c0_i32_0 = arith.constant 0 : i32
    return %arg0, %c0_i32 : i32, i32
  }
}

</mosaic_0001>

<llo_original>
// kernel: actor_sac_forward.1
$region0: #{actor_sac_forward.1}
  #allocation0 [shape = 'u32[]', space=smem, size = 0x4, offset = 0x4, fixed_abs, tag = 'smem constant byte address 0x4 - core index']
  #allocation1 [shape = 'u32[144,128]{1,0:T(1,128)}', space=vmem, size = 0x12000, scoped, tag = 'internal scratch']
  %s0 = inlined_call_operand.vmem [shape: bf16[16,16], index: 0, kind: input, shape index: {}]
  %s1 = inlined_call_operand.vmem [shape: bf16[16,32], index: 1, kind: input, shape index: {}]
  %s2 = inlined_call_operand.hbm [shape: f32[1,32], index: 2, kind: input, shape index: {}]
  %s3 = inlined_call_operand.vmem [shape: bf16[32,32], index: 3, kind: input, shape index: {}]
  %s4 = inlined_call_operand.hbm [shape: f32[1,32], index: 4, kind: input, shape index: {}]
  %s5 = inlined_call_operand.vmem [shape: bf16[32,32], index: 5, kind: input, shape index: {}]
  %s6 = inlined_call_operand.hbm [shape: f32[1,32], index: 6, kind: input, shape index: {}]
  %s7 = inlined_call_operand.vmem [shape: bf16[32,32], index: 7, kind: input, shape index: {}]
  %s8 = inlined_call_operand.hbm [shape: f32[1,32], index: 8, kind: input, shape index: {}]
  %s9 = inlined_call_operand.vmem [shape: bf16[32,8], index: 9, kind: input, shape index: {}]
  %s10 = inlined_call_operand.vmem [shape: f32[1,8], index: 10, kind: input, shape index: {}]
  %s11 = inlined_call_operand.vmem [shape: f32[16,8], index: 11, kind: output, shape index: {}]
  %s12 = sld [smem:[#allocation0]]
  $region70: #{actor_sac_forward.1} parent=0
    _
  %s14 = ssub.s32 1, %s12
  %s15 = scalar_select 0, %s14, %s12
  $region1: #{actor_sac_forward.1} parent=0
    #allocation2 [shape = 'u8[512]{0}', space=vmem, size = 0x400, scoped, tag = 'input window, operand 2, single buffered']
    #allocation3 [shape = 's32[1]{0}', space=sflag, size = 0x4, scoped, tag = 'scoped memory for actor_sac_forward.1']
    #allocation4 [shape = 'u8[512]{0}', space=vmem, size = 0x400, scoped, tag = 'input window, operand 4, single buffered']
    #allocation5 [shape = 's32[1]{0}', space=sflag, size = 0x4, scoped, tag = 'scoped memory for actor_sac_forward.1']
    #allocation6 [shape = 'u8[512]{0}', space=vmem, size = 0x400, scoped, tag = 'input window, operand 6, single buffered']
    #allocation7 [shape = 'u8[512]{0}', space=vmem, size = 0x400, scoped, tag = 'input window, operand 8, single buffered']
    #allocation8 [shape = 's32[1]{0}', space=sflag, size = 0x4, scoped, tag = 'scoped memory for actor_sac_forward.1']
    %16 = vsyncpa [#allocation3], 0
    %17 = vsyncpa [#allocation5], 0
    %18 = vsyncpa [#allocation8], 0
    // Predicated region
    $region2: #{actor_sac_forward.1} parent=1 // pred_check
      _
    $region3: #{actor_sac_forward.1} parent=1 // pred_check_branch
      %20 = sbr.rel (0) target = $region5
    $region4: #{actor_sac_forward.1} parent=1 // pred_region
      _
    $region5: #{actor_sac_forward.1} parent=1 // pred_fallthru
      _
    // Predicated region
    $region6: #{actor_sac_forward.1} parent=1 // pred_check
      _
    $region7: #{actor_sac_forward.1} parent=1 // pred_check_branch
      %22 = sbr.rel (0) target = $region9
    $region8: #{actor_sac_forward.1} parent=1 // pred_region
      _
    $region9: #{actor_sac_forward.1} parent=1 // pred_fallthru
      _
    // Predicated region
    $region10: #{actor_sac_forward.1} parent=1 // pred_check
      _
    $region11: #{actor_sac_forward.1} parent=1 // pred_check_branch
      %24 = sbr.rel (0) target = $region13
    $region12: #{actor_sac_forward.1} parent=1 // pred_region
      %s26 = ssub.s32 16, 16
      %27 = vsyncadd [#allocation3], %s26
      %s29 = sshll.u32 [#allocation2], 4
      %s30 = int_to_ptr.vmem [resolvable:$true] %s29
      %32 = dma.hbm_to_vmem [thread:$0]  %s2, 16, %s30, [#allocation3]
    $region13: #{actor_sac_forward.1} parent=1 // pred_fallthru
      _
    // Predicated region
    $region14: #{actor_sac_forward.1} parent=1 // pred_check
      _
    $region15: #{actor_sac_forward.1} parent=1 // pred_check_branch
      %34 = sbr.rel (0) target = $region17
    $region16: #{actor_sac_forward.1} parent=1 // pred_region
      _
    $region17: #{actor_sac_forward.1} parent=1 // pred_fallthru
      _
    // Predicated region
    $region18: #{actor_sac_forward.1} parent=1 // pred_check
      _
    $region19: #{actor_sac_forward.1} parent=1 // pred_check_branch
      %36 = sbr.rel (0) target = $region21
    $region20: #{actor_sac_forward.1} parent=1 // pred_region
      %s38 = ssub.s32 16, 16
      %39 = vsyncadd [#allocation5], %s38
      %s41 = sshll.u32 [#allocation4], 4
      %s42 = int_to_ptr.vmem [resolvable:$true] %s41
      %44 = dma.hbm_to_vmem [thread:$0]  %s4, 16, %s42, [#allocation5]
    $region21: #{actor_sac_forward.1} parent=1 // pred_fallthru
      _
    // Predicated region
    $region22: #{actor_sac_forward.1} parent=1 // pred_check
      _
    $region23: #{actor_sac_forward.1} parent=1 // pred_check_branch
      %46 = sbr.rel (0) target = $region25
    $region24: #{actor_sac_forward.1} parent=1 // pred_region
      _
    $region25: #{actor_sac_forward.1} parent=1 // pred_fallthru
      _
    // Predicated region
    $region26: #{actor_sac_forward.1} parent=1 // pred_check
      _
    $region27: #{actor_sac_forward.1} parent=1 // pred_check_branch
      %48 = sbr.rel (0) target = $region29
    $region28: #{actor_sac_forward.1} parent=1 // pred_region
      %s50 = ssub.s32 16, 16
      %51 = vsyncadd [#allocation5], %s50
      %s53 = sshll.u32 [#allocation6], 4
      %s54 = int_to_ptr.vmem [resolvable:$true] %s53
      %56 = dma.hbm_to_vmem [thread:$0]  %s6, 16, %s54, [#allocation5]
    $region29: #{actor_sac_forward.1} parent=1 // pred_fallthru
      _
    // Predicated region
    $region30: #{actor_sac_forward.1} parent=1 // pred_check
      _
    $region31: #{actor_sac_forward.1} parent=1 // pred_check_branch
      %58 = sbr.rel (0) target = $region33
    $region32: #{actor_sac_forward.1} parent=1 // pred_region
      _
    $region33: #{actor_sac_forward.1} parent=1 // pred_fallthru
      _
    // Predicated region
    $region34: #{actor_sac_forward.1} parent=1 // pred_check
      _
    $region35: #{actor_sac_forward.1} parent=1 // pred_check_branch
      %60 = sbr.rel (0) target = $region37
    $region36: #{actor_sac_forward.1} parent=1 // pred_region
      %s62 = ssub.s32 16, 16
      %63 = vsyncadd [#allocation8], %s62
      %s65 = sshll.u32 [#allocation7], 4
      %s66 = int_to_ptr.vmem [resolvable:$true] %s65
      %68 = dma.hbm_to_vmem [thread:$0]  %s8, 16, %s66, [#allocation8]
    $region37: #{actor_sac_forward.1} parent=1 // pred_fallthru
      _
    // Predicated region
    $region38: #{actor_sac_forward.1} parent=1 // pred_check
      _
    $region39: #{actor_sac_forward.1} parent=1 // pred_check_branch
      %70 = sbr.rel (0) target = $region41
    $region40: #{actor_sac_forward.1} parent=1 // pred_region
      _
    $region41: #{actor_sac_forward.1} parent=1 // pred_fallthru
      _
    // Predicated region
    $region42: #{actor_sac_forward.1} parent=1 // pred_check
      _
    $region43: #{actor_sac_forward.1} parent=1 // pred_check_branch
      %72 = sbr.rel (0) target = $region45
    $region44: #{actor_sac_forward.1} parent=1 // pred_region
      _
    $region45: #{actor_sac_forward.1} parent=1 // pred_fallthru
      _
    // Predicated region
    $region46: #{actor_sac_forward.1} parent=1 // pred_check
      _
    $region47: #{actor_sac_forward.1} parent=1 // pred_check_branch
      %74 = sbr.rel (0) target = $region49
    $region48: #{actor_sac_forward.1} parent=1 // pred_region
      %75 = dma.done [#allocation3], 16
    $region49: #{actor_sac_forward.1} parent=1 // pred_fallthru
      _
    // Predicated region
    $region50: #{actor_sac_forward.1} parent=1 // pred_check
      _
    $region51: #{actor_sac_forward.1} parent=1 // pred_check_branch
      %77 = sbr.rel (0) target = $region53
    $region52: #{actor_sac_forward.1} parent=1 // pred_region
      %78 = dma.done [#allocation5], 16
    $region53: #{actor_sac_forward.1} parent=1 // pred_fallthru
      _
    // Predicated region
    $region54: #{actor_sac_forward.1} parent=1 // pred_check
      _
    $region55: #{actor_sac_forward.1} parent=1 // pred_check_branch
      %80 = sbr.rel (0) target = $region57
    $region56: #{actor_sac_forward.1} parent=1 // pred_region
      %81 = dma.done [#allocation5], 16
    $region57: #{actor_sac_forward.1} parent=1 // pred_fallthru
      _
    // Predicated region
    $region58: #{actor_sac_forward.1} parent=1 // pred_check
      _
    $region59: #{actor_sac_forward.1} parent=1 // pred_check_branch
      %83 = sbr.rel (0) target = $region61
    $region60: #{actor_sac_forward.1} parent=1 // pred_region
      %84 = dma.done [#allocation8], 16
    $region61: #{actor_sac_forward.1} parent=1 // pred_fallthru
      _
    %v86 = vld [vmem:[%s0] sm:$0xf]
    %v87 = vld [vmem:[%s0 + $0x4] sm:$0xf]
    %v88 = vld [vmem:[%s1] sm:$0xf]
    %v89 = vld [vmem:[%s1 + $0x4] sm:$0xf]
    %v90 = vld [vmem:[#allocation2] sm:$0x1]
    %v92 = vlaneseq
    %v93 = vshrl.u32 %v92, 7
    %v94 = vsub.s32 0, %v93
    %v95 = vrot.slane %v90, %v94
    %v99 = vunpack.c.l.b16 %v86
    %v100 = vunpack.c.l.b16 %v87
    %v101 = vpack.c.b16 %v100, %v99
    %v104 = vunpack.c.l.b16 %v88
    %v105 = vunpack.c.l.b16 %v89
    %v106 = vpack.c.b16 %v105, %v104
    %vm108 = vcmask 130048
    %v110 = vsel %vm108, %v101, 0
    %112 = vmatprep.subr.bf16.mxu0 0
    %113 = vmatpush1.bf16.msra.mxu0 %v106
    %114 = vmatprep.subr.bf16.mxu0 0
    %115 = vmatpush1.bf16.msra.mxu0 0
    %116 = vmatprep.subr.bf16.mxu0 0
    %117 = vmatpush1.bf16.msra.mxu0 0
    %118 = vmatprep.subr.bf16.mxu0 0
    %119 = vmatpush1.bf16.msra.mxu0 0
    %120 = vmatprep.subr.bf16.mxu0 0
    %121 = vmatpush1.bf16.msra.mxu0 0
    %122 = vmatprep.subr.bf16.mxu0 0
    %123 = vmatpush1.bf16.msra.mxu0 0
    %124 = vmatprep.subr.bf16.mxu0 0
    %125 = vmatpush1.bf16.msra.mxu0 0
    %126 = vmatprep.subr.bf16.mxu0 0
    %127 = vmatpush1.bf16.msra.mxu0 0
    %128 = vmatprep.subr.bf16.mxu0 0
    %129 = vmatpush1.bf16.msra.mxu0 0
    %130 = vmatprep.subr.bf16.mxu0 0
    %131 = vmatpush1.bf16.msra.mxu0 0
    %132 = vmatprep.subr.bf16.mxu0 0
    %133 = vmatpush1.bf16.msra.mxu0 0
    %134 = vmatprep.subr.bf16.mxu0 0
    %135 = vmatpush1.bf16.msra.mxu0 0
    %136 = vmatprep.subr.bf16.mxu0 0
    %137 = vmatpush1.bf16.msra.mxu0 0
    %138 = vmatprep.subr.bf16.mxu0 0
    %139 = vmatpush1.bf16.msra.mxu0 0
    %140 = vmatprep.subr.bf16.mxu0 0
    %141 = vmatpush1.bf16.msra.mxu0 0
    %142 = vmatprep.subr.bf16.mxu0 0
    %143 = vmatpush1.bf16.msra.mxu0 0
    %144 = vmatprep.mubr.bf16.mxu0 0
    %145 = vmatmul.mubr.bf16.gmra.mrb[0].mxu0 %v110
    %v146 = vpop.f32.mrb[0].mxu0
    %v147 = vadd.f32 %v95, %v146
    %v148 = vpop.f32.mrb[0].mxu0
    %v149 = vpop.f32.mrb[0].mxu0
    %v150 = vadd.f32 %v95, %v149
    %v151 = vpop.f32.mrb[0].mxu0
    %152 = vdwg.mxu0
    %v153 = vmax.f32 %v147, 0.0
    %v154 = vmax.f32 %v150, 0.0
    %v155 = vpack.c.bf16 %v154, %v153
    %v156 = vld [vmem:[%s3] sm:$0xf]
    %v157 = vld [vmem:[%s3 + $0x4] sm:$0xf]
    %v158 = vld [vmem:[%s3 + $0x8] sm:$0xf]
    %v159 = vld [vmem:[%s3 + $0xc] sm:$0xf]
    %v160 = vld [vmem:[#allocation4] sm:$0x1]
    %v162 = vlaneseq
    %v163 = vshrl.u32 %v162, 7
    %v164 = vsub.s32 0, %v163
    %v165 = vrot.slane %v160, %v164
    %v171 = vunpack.c.l.b16 %v156
    %v172 = vunpack.c.l.b16 %v157
    %v173 = vunpack.c.l.b16 %v158
    %v174 = vunpack.c.l.b16 %v159
    %v175 = vpack.c.b16 %v172, %v171
    %v176 = vpack.c.b16 %v174, %v173
    %vm179 = vcmask 261120
    %v181 = vsel %vm179, %v155, 0
    %183 = vmatprep.subr.bf16.mxu0 0
    %184 = vmatpush1.bf16.msra.mxu0 %v175
    %185 = vmatprep.subr.bf16.mxu0 0
    %186 = vmatpush1.bf16.msra.mxu0 %v176
    %187 = vmatprep.subr.bf16.mxu0 0
    %188 = vmatpush1.bf16.msra.mxu0 0
    %189 = vmatprep.subr.bf16.mxu0 0
    %190 = vmatpush1.bf16.msra.mxu0 0
    %191 = vmatprep.subr.bf16.mxu0 0
    %192 = vmatpush1.bf16.msra.mxu0 0
    %193 = vmatprep.subr.bf16.mxu0 0
    %194 = vmatpush1.bf16.msra.mxu0 0
    %195 = vmatprep.subr.bf16.mxu0 0
    %196 = vmatpush1.bf16.msra.mxu0 0
    %197 = vmatprep.subr.bf16.mxu0 0
    %198 = vmatpush1.bf16.msra.mxu0 0
    %199 = vmatprep.subr.bf16.mxu0 0
    %200 = vmatpush1.bf16.msra.mxu0 0
    %201 = vmatprep.subr.bf16.mxu0 0
    %202 = vmatpush1.bf16.msra.mxu0 0
    %203 = vmatprep.subr.bf16.mxu0 0
    %204 = vmatpush1.bf16.msra.mxu0 0
    %205 = vmatprep.subr.bf16.mxu0 0
    %206 = vmatpush1.bf16.msra.mxu0 0
    %207 = vmatprep.subr.bf16.mxu0 0
    %208 = vmatpush1.bf16.msra.mxu0 0
    %209 = vmatprep.subr.bf16.mxu0 0
    %210 = vmatpush1.bf16.msra.mxu0 0
    %211 = vmatprep.subr.bf16.mxu0 0
    %212 = vmatpush1.bf16.msra.mxu0 0
    %213 = vmatprep.subr.bf16.mxu0 0
    %214 = vmatpush1.bf16.msra.mxu0 0
    %215 = vmatprep.mubr.bf16.mxu0 0
    %216 = vmatmul.mubr.bf16.gmra.mrb[0].mxu0 %v181
    %v217 = vpop.f32.mrb[0].mxu0
    %v218 = vadd.f32 %v165, %v217
    %v219 = vpop.f32.mrb[0].mxu0
    %v220 = vpop.f32.mrb[0].mxu0
    %v221 = vadd.f32 %v165, %v220
    %v222 = vpop.f32.mrb[0].mxu0
    %223 = vdwg.mxu0
    %v224 = vmax.f32 %v218, 0.0
    %v225 = vmax.f32 %v221, 0.0
    %v226 = vpack.c.bf16 %v225, %v224
    %v227 = vld [vmem:[%s5] sm:$0xf]
    %v228 = vld [vmem:[%s5 + $0x4] sm:$0xf]
    %v229 = vld [vmem:[%s5 + $0x8] sm:$0xf]
    %v230 = vld [vmem:[%s5 + $0xc] sm:$0xf]
    %v231 = vld [vmem:[#allocation6] sm:$0x1]
    %v233 = vlaneseq
    %v234 = vshrl.u32 %v233, 7
    %v235 = vsub.s32 0, %v234
    %v236 = vrot.slane %v231, %v235
    %v242 = vunpack.c.l.b16 %v227
    %v243 = vunpack.c.l.b16 %v228
    %v244 = vunpack.c.l.b16 %v229
    %v245 = vunpack.c.l.b16 %v230
    %v246 = vpack.c.b16 %v243, %v242
    %v247 = vpack.c.b16 %v245, %v244
    %v251 = vsel %vm179, %v226, 0
    %253 = vmatprep.subr.bf16.mxu0 0
    %254 = vmatpush1.bf16.msra.mxu0 %v246
    %255 = vmatprep.subr.bf16.mxu0 0
    %256 = vmatpush1.bf16.msra.mxu0 %v247
    %257 = vmatprep.subr.bf16.mxu0 0
    %258 = vmatpush1.bf16.msra.mxu0 0
    %259 = vmatprep.subr.bf16.mxu0 0
    %260 = vmatpush1.bf16.msra.mxu0 0
    %261 = vmatprep.subr.bf16.mxu0 0
    %262 = vmatpush1.bf16.msra.mxu0 0
    %263 = vmatprep.subr.bf16.mxu0 0
    %264 = vmatpush1.bf16.msra.mxu0 0
    %265 = vmatprep.subr.bf16.mxu0 0
    %266 = vmatpush1.bf16.msra.mxu0 0
    %267 = vmatprep.subr.bf16.mxu0 0
    %268 = vmatpush1.bf16.msra.mxu0 0
    %269 = vmatprep.subr.bf16.mxu0 0
    %270 = vmatpush1.bf16.msra.mxu0 0
    %271 = vmatprep.subr.bf16.mxu0 0
    %272 = vmatpush1.bf16.msra.mxu0 0
    %273 = vmatprep.subr.bf16.mxu0 0
    %274 = vmatpush1.bf16.msra.mxu0 0
    %275 = vmatprep.subr.bf16.mxu0 0
    %276 = vmatpush1.bf16.msra.mxu0 0
    %277 = vmatprep.subr.bf16.mxu0 0
    %278 = vmatpush1.bf16.msra.mxu0 0
    %279 = vmatprep.subr.bf16.mxu0 0
    %280 = vmatpush1.bf16.msra.mxu0 0
    %281 = vmatprep.subr.bf16.mxu0 0
    %282 = vmatpush1.bf16.msra.mxu0 0
    %283 = vmatprep.subr.bf16.mxu0 0
    %284 = vmatpush1.bf16.msra.mxu0 0
    %285 = vmatprep.mubr.bf16.mxu0 0
    %286 = vmatmul.mubr.bf16.gmra.mrb[0].mxu0 %v251
    %v287 = vpop.f32.mrb[0].mxu0
    %v288 = vadd.f32 %v236, %v287
    %v289 = vpop.f32.mrb[0].mxu0
    %v290 = vpop.f32.mrb[0].mxu0
    %v291 = vadd.f32 %v236, %v290
    %v292 = vpop.f32.mrb[0].mxu0
    %293 = vdwg.mxu0
    %v294 = vmax.f32 %v288, 0.0
    %v295 = vmax.f32 %v291, 0.0
    %v296 = vpack.c.bf16 %v295, %v294
    %v297 = vld [vmem:[%s7] sm:$0xf]
    %v298 = vld [vmem:[%s7 + $0x4] sm:$0xf]
    %v299 = vld [vmem:[%s7 + $0x8] sm:$0xf]
    %v300 = vld [vmem:[%s7 + $0xc] sm:$0xf]
    %v301 = vld [vmem:[#allocation7] sm:$0x1]
    %v303 = vlaneseq
    %v304 = vshrl.u32 %v303, 7
    %v305 = vsub.s32 0, %v304
    %v306 = vrot.slane %v301, %v305
    %v312 = vunpack.c.l.b16 %v297
    %v313 = vunpack.c.l.b16 %v298
    %v314 = vunpack.c.l.b16 %v299
    %v315 = vunpack.c.l.b16 %v300
    %v316 = vpack.c.b16 %v313, %v312
    %v317 = vpack.c.b16 %v315, %v314
    %v321 = vsel %vm179, %v296, 0
    %323 = vmatprep.subr.bf16.mxu0 0
    %324 = vmatpush1.bf16.msra.mxu0 %v316
    %325 = vmatprep.subr.bf16.mxu0 0
    %326 = vmatpush1.bf16.msra.mxu0 %v317
    %327 = vmatprep.subr.bf16.mxu0 0
    %328 = vmatpush1.bf16.msra.mxu0 0
    %329 = vmatprep.subr.bf16.mxu0 0
    %330 = vmatpush1.bf16.msra.mxu0 0
    %331 = vmatprep.subr.bf16.mxu0 0
    %332 = vmatpush1.bf16.msra.mxu0 0
    %333 = vmatprep.subr.bf16.mxu0 0
    %334 = vmatpush1.bf16.msra.mxu0 0
    %335 = vmatprep.subr.bf16.mxu0 0
    %336 = vmatpush1.bf16.msra.mxu0 0
    %337 = vmatprep.subr.bf16.mxu0 0
    %338 = vmatpush1.bf16.msra.mxu0 0
    %339 = vmatprep.subr.bf16.mxu0 0
    %340 = vmatpush1.bf16.msra.mxu0 0
    %341 = vmatprep.subr.bf16.mxu0 0
    %342 = vmatpush1.bf16.msra.mxu0 0
    %343 = vmatprep.subr.bf16.mxu0 0
    %344 = vmatpush1.bf16.msra.mxu0 0
    %345 = vmatprep.subr.bf16.mxu0 0
    %346 = vmatpush1.bf16.msra.mxu0 0
    %347 = vmatprep.subr.bf16.mxu0 0
    %348 = vmatpush1.bf16.msra.mxu0 0
    %349 = vmatprep.subr.bf16.mxu0 0
    %350 = vmatpush1.bf16.msra.mxu0 0
    %351 = vmatprep.subr.bf16.mxu0 0
    %352 = vmatpush1.bf16.msra.mxu0 0
    %353 = vmatprep.subr.bf16.mxu0 0
    %354 = vmatpush1.bf16.msra.mxu0 0
    %355 = vmatprep.mubr.bf16.mxu0 0
    %356 = vmatmul.mubr.bf16.gmra.mrb[0].mxu0 %v321
    %v357 = vpop.f32.mrb[0].mxu0
    %v358 = vadd.f32 %v306, %v357
    %v359 = vpop.f32.mrb[0].mxu0
    %v360 = vpop.f32.mrb[0].mxu0
    %v361 = vadd.f32 %v306, %v360
    %v362 = vpop.f32.mrb[0].mxu0
    %363 = vdwg.mxu0
    %v364 = vadd.f32 %v358, 3.0
    %v365 = vadd.f32 %v361, 3.0
    %v366 = vmax.f32 %v364, 0.0
    %v367 = vmax.f32 %v365, 0.0
    %v368 = vmin.f32 %v366, 6.0
    %v369 = vmin.f32 %v367, 6.0
    %v370 = vmul.f32 %v358, %v368
    %v371 = vmul.f32 %v361, %v369
    %v372 = vmul.f32 %v370, 0.16666667
    %v373 = vmul.f32 %v371, 0.16666667
    %v374 = vpack.c.bf16 %v373, %v372
    %v375 = vld [vmem:[%s9] sm:$0xf]
    %v376 = vld [vmem:[%s9 + $0x4] sm:$0xf]
    %v377 = vld [vmem:[%s9 + $0x8] sm:$0xf]
    %v378 = vld [vmem:[%s9 + $0xc] sm:$0xf]
    %v379 = vld [vmem:[%s10] sm:$0x1]
    %v381 = vlaneseq
    %v382 = vshrl.u32 %v381, 7
    %v383 = vsub.s32 0, %v382
    %v384 = vrot.slane %v379, %v383
    %v390 = vunpack.c.l.b16 %v375
    %v391 = vunpack.c.l.b16 %v376
    %v392 = vunpack.c.l.b16 %v377
    %v393 = vunpack.c.l.b16 %v378
    %v394 = vpack.c.b16 %v391, %v390
    %v395 = vpack.c.b16 %v393, %v392
    %v399 = vsel %vm179, %v374, 0
    %401 = vmatprep.subr.bf16.mxu0 0
    %402 = vmatpush1.bf16.msra.mxu0 %v394
    %403 = vmatprep.subr.bf16.mxu0 0
    %404 = vmatpush1.bf16.msra.mxu0 %v395
    %405 = vmatprep.subr.bf16.mxu0 0
    %406 = vmatpush1.bf16.msra.mxu0 0
    %407 = vmatprep.subr.bf16.mxu0 0
    %408 = vmatpush1.bf16.msra.mxu0 0
    %409 = vmatprep.subr.bf16.mxu0 0
    %410 = vmatpush1.bf16.msra.mxu0 0
    %411 = vmatprep.subr.bf16.mxu0 0
    %412 = vmatpush1.bf16.msra.mxu0 0
    %413 = vmatprep.subr.bf16.mxu0 0
    %414 = vmatpush1.bf16.msra.mxu0 0
    %415 = vmatprep.subr.bf16.mxu0 0
    %416 = vmatpush1.bf16.msra.mxu0 0
    %417 = vmatprep.subr.bf16.mxu0 0
    %418 = vmatpush1.bf16.msra.mxu0 0
    %419 = vmatprep.subr.bf16.mxu0 0
    %420 = vmatpush1.bf16.msra.mxu0 0
    %421 = vmatprep.subr.bf16.mxu0 0
    %422 = vmatpush1.bf16.msra.mxu0 0
    %423 = vmatprep.subr.bf16.mxu0 0
    %424 = vmatpush1.bf16.msra.mxu0 0
    %425 = vmatprep.subr.bf16.mxu0 0
    %426 = vmatpush1.bf16.msra.mxu0 0
    %427 = vmatprep.subr.bf16.mxu0 0
    %428 = vmatpush1.bf16.msra.mxu0 0
    %429 = vmatprep.subr.bf16.mxu0 0
    %430 = vmatpush1.bf16.msra.mxu0 0
    %431 = vmatprep.subr.bf16.mxu0 0
    %432 = vmatpush1.bf16.msra.mxu0 0
    %433 = vmatprep.mubr.bf16.mxu0 0
    %434 = vmatmul.mubr.bf16.gmra.mrb[0].mxu0 %v399
    %v435 = vpop.f32.mrb[0].mxu0
    %v436 = vadd.f32 %v384, %v435
    %v437 = vpop.f32.mrb[0].mxu0
    %v438 = vpop.f32.mrb[0].mxu0
    %v439 = vadd.f32 %v384, %v438
    %v440 = vpop.f32.mrb[0].mxu0
    %441 = vdwg.mxu0
    %v442 = vtanh.pop %v436
    %v443 = vtanh.pop %v439
    %vm444 = vcmask 64512
    %445 = vst.msk [vmem:[%s11] sm:$0xff] %vm444, %v442
    %446 = vst.msk [vmem:[%s11 + $0x8] sm:$0xff] %vm444, %v443
    // Predicated region
    $region62: #{actor_sac_forward.1} parent=1 // pred_check
      _
    $region63: #{actor_sac_forward.1} parent=1 // pred_check_branch
      %448 = sbr.rel (0) target = $region65
    $region64: #{actor_sac_forward.1} parent=1 // pred_region
      _
    $region65: #{actor_sac_forward.1} parent=1 // pred_fallthru
      _
    // Predicated region
    $region66: #{actor_sac_forward.1} parent=1 // pred_check
      _
    $region67: #{actor_sac_forward.1} parent=1 // pred_check_branch
      %450 = sbr.rel (0) target = $region69
    $region68: #{actor_sac_forward.1} parent=1 // pred_region
      _
    $region69: #{actor_sac_forward.1} parent=1 // pred_fallthru
      _
    %451 = vsyncpa [#allocation3], 1
    %452 = vsyncpa [#allocation5], 1
    %453 = vsyncpa [#allocation8], 1

</llo_original>
